<compile_context>
chip_gen: v7x
topology: tpu7x:2x2x1
jax: 0.10.0
libtpu: 0.0.40
codegen_flags: <defaults>
</compile_context>

<pallas_src>
import jax
import jax.numpy as jnp
from jax.experimental import pallas as pl
from jax.experimental.pallas import tpu as pltpu


def _fc_layers_kernel(xT_ref, w1_ref, b1_ref, w2_ref, b2_ref, w3_ref, b3_ref,
                      oT_ref):
    # One lane-dense column tile of x^T flows through all three layers.
    xT = xT_ref[...]                                        # (n_features, tm)
    cdt = w1_ref.dtype                                      # matmul input dtype

    h1 = jnp.dot(w1_ref[...], xT, preferred_element_type=jnp.float32)
    h1 = jnp.maximum(h1 + b1_ref[...], 0.0)                 # bias + ReLU in f32
    # do1: dropout -> identity at inference

    h2 = jnp.dot(w2_ref[...], h1.astype(cdt), preferred_element_type=jnp.float32)
    h2 = jnp.maximum(h2 + b2_ref[...], 0.0)
    # do2 is declared but unused in the original forward

    out = jnp.dot(w3_ref[...], h2.astype(cdt), preferred_element_type=jnp.float32)
    oT_ref[...] = (out + b3_ref[...]).astype(oT_ref.dtype)


def fc_layers_forward(x, params, *, tm=2048, compute_dtype=jnp.bfloat16):
    """x: [batch, n_symbols, n_features] f32 -> [batch, n_symbols, out3] f32.

    params: (w1, b1, w2, b2, w3, b3) with weights in PyTorch layout [out, in]
    and biases as column vectors [out, 1].
    """
    w1, b1, w2, b2, w3, b3 = params
    batch, n_symbols, n_features = x.shape
    h1d, h2d, h3d = w1.shape[0], w2.shape[0], w3.shape[0]
    M = batch * n_symbols

    # Feature-major (transposed) input so M lands on the lane axis; the cast
    # to the streaming dtype fuses with the transpose in a single XLA pass.
    xT = x.reshape(M, n_features).T.astype(compute_dtype)    # (n_features, M)
    w1c, w2c, w3c = (w.astype(compute_dtype) for w in (w1, w2, w3))

    # Row tile: multiple of 128 (lane width) unless one block covers all of M.
    tm = max(128, (int(tm) // 128) * 128)
    block_m = M if M <= tm else tm
    grid = (pl.cdiv(M, block_m),)

    w_itemsize = jnp.dtype(compute_dtype).itemsize
    cost = pl.CostEstimate(
        flops=2 * M * (n_features * h1d + h1d * h2d + h2d * h3d),
        transcendentals=0,
        bytes_accessed=(M * n_features * xT.dtype.itemsize          # x^T stream
                        + M * h3d * 4                               # y^T writeback
                        + (n_features * h1d + h1d * h2d + h2d * h3d) * w_itemsize
                        + (h1d + h2d + h3d) * 4))                   # biases

    outT = pl.pallas_call(
        _fc_layers_kernel,
        out_shape=jax.ShapeDtypeStruct((h3d, M), jnp.float32),
        grid_spec=pltpu.PrefetchScalarGridSpec(
            num_scalar_prefetch=0,
            grid=grid,
            in_specs=[
                pl.BlockSpec((n_features, block_m), lambda i: (0, i)),  # x^T tile
                pl.BlockSpec((h1d, n_features), lambda i: (0, 0)),      # W1
                pl.BlockSpec((h1d, 1), lambda i: (0, 0)),               # b1
                pl.BlockSpec((h2d, h1d), lambda i: (0, 0)),             # W2
                pl.BlockSpec((h2d, 1), lambda i: (0, 0)),               # b2
                pl.BlockSpec((h3d, h2d), lambda i: (0, 0)),             # W3
                pl.BlockSpec((h3d, 1), lambda i: (0, 0)),               # b3
            ],
            out_specs=pl.BlockSpec((h3d, block_m), lambda i: (0, i)),   # y^T tile
        ),
        compiler_params=pltpu.CompilerParams(
            dimension_semantics=("parallel",)),   # v7x: shard rows over 2 TCs
        cost_estimate=cost,
    )(xT, w1c, b1, w2c, b2, w3c, b3)

    # Tiny (M x h3d) transpose back to the PyTorch output layout.
    return outT.T.reshape(batch, n_symbols, h3d)


def init_params(key, n_features, output_sizes):
    """nn.Linear-style init; weights in PyTorch layout [out, in], biases [out, 1]."""
    dims = [n_features] + list(output_sizes)
    params = []
    for layer in range(3):
        fan_in, fan_out = dims[layer], dims[layer + 1]
        key, kw, kb = jax.random.split(key, 3)
        bound = 1.0 / jnp.sqrt(jnp.float32(fan_in))
        w = jax.random.uniform(kw, (fan_out, fan_in), jnp.float32, -bound, bound)
        b = jax.random.uniform(kb, (fan_out, 1), jnp.float32, -bound, bound)
        params += [w, b]
    return tuple(params)


def reference_forward(x, params, compute_dtype=jnp.float32):
    """Pure-JAX reference; mirrors the kernel's matmul-input casts."""
    w1, b1, w2, b2, w3, b3 = params
    c = lambda a: a.astype(compute_dtype).astype(jnp.float32)
    h1 = jnp.maximum(c(x) @ c(w1).T + b1[:, 0], 0.0)
    h2 = jnp.maximum(c(h1) @ c(w2).T + b2[:, 0], 0.0)
    return c(h2) @ c(w3).T + b3[:, 0]


if __name__ == "__main__":
    # Shapes consistent with the module: n_days_input=5 -> n_features=20,
    # output_sizes=(32, 16, 8); small batch / n_symbols for the smoke test.
    n_features = 5 * 4
    output_sizes = (32, 16, 8)

    key = jax.random.PRNGKey(0)
    kx, kp, kx2 = jax.random.split(key, 3)
    params = init_params(kp, n_features, output_sizes)

    # 1) tiny case: one block covers the whole problem (grid=(1,)).
    batch, n_symbols = 2, 8
    x = jax.random.normal(kx, (batch, n_symbols, n_features), jnp.float32)
    out = jax.block_until_ready(fc_layers_forward(x, params))
    ref = reference_forward(x, params, compute_dtype=jnp.bfloat16)
    assert out.shape == (batch, n_symbols, output_sizes[2])
    assert jnp.allclose(out, ref, atol=1e-2, rtol=1e-2), float(
        jnp.max(jnp.abs(out - ref)))

    # 2) multi-tile case with a partial last block (exercises the cdiv grid
    #    path and the lane-masked edge writeback).  M = 500, tm = 128.
    batch2, n_symbols2 = 5, 100
    x2 = jax.random.normal(kx2, (batch2, n_symbols2, n_features), jnp.float32)
    out2 = jax.block_until_ready(fc_layers_forward(x2, params, tm=128))
    ref2 = reference_forward(x2, params, compute_dtype=jnp.bfloat16)
    assert out2.shape == (batch2, n_symbols2, output_sizes[2])
    assert jnp.allclose(out2, ref2, atol=1e-2, rtol=1e-2), float(
        jnp.max(jnp.abs(out2 - ref2)))

    print("KERNEL_OK")
</pallas_src>

<mosaic_0001>
module attributes {stable_mosaic.version = 11 : i64} {
  func.func @_fc_layers_kernel(%arg0: i32, %arg1: memref<20x16xbf16, #tpu.memory_space<vmem>>, %arg2: memref<32x20xbf16, #tpu.memory_space<vmem>>, %arg3: memref<32x1xf32, #tpu.memory_space<vmem>>, %arg4: memref<16x32xbf16, #tpu.memory_space<vmem>>, %arg5: memref<16x1xf32, #tpu.memory_space<vmem>>, %arg6: memref<8x16xbf16, #tpu.memory_space<vmem>>, %arg7: memref<8x1xf32, #tpu.memory_space<vmem>>, %arg8: memref<8x16xf32, #tpu.memory_space<vmem>>) attributes {dimension_semantics = [#tpu.dimension_semantics<parallel>], iteration_bounds = array<i64: 1>, scalar_prefetch = 0 : i64, scratch_operands = 0 : i64, tpu.core_type = #tpu.core_type<tc>, window_params = [{transform_indices = @transform_0, window_bounds = array<i64: 20, 16>}, {pipeline_mode = #tpu.pipeline_mode<synchronous>, transform_indices = @transform_1, window_bounds = array<i64: 32, 20>}, {pipeline_mode = #tpu.pipeline_mode<synchronous>, transform_indices = @transform_2, window_bounds = array<i64: 32, 1>}, {pipeline_mode = #tpu.pipeline_mode<synchronous>, transform_indices = @transform_3, window_bounds = array<i64: 16, 32>}, {pipeline_mode = #tpu.pipeline_mode<synchronous>, transform_indices = @transform_4, window_bounds = array<i64: 16, 1>}, {pipeline_mode = #tpu.pipeline_mode<synchronous>, transform_indices = @transform_5, window_bounds = array<i64: 8, 16>}, {pipeline_mode = #tpu.pipeline_mode<synchronous>, transform_indices = @transform_6, window_bounds = array<i64: 8, 1>}, {transform_indices = @transform_7, window_bounds = array<i64: 8, 16>}]} {
    %c0 = arith.constant 0 : index
    %c0_0 = arith.constant 0 : index
    %0 = vector.load %arg1[%c0, %c0_0] : memref<20x16xbf16, #tpu.memory_space<vmem>>, vector<20x16xbf16>
    %c0_1 = arith.constant 0 : index
    %c0_2 = arith.constant 0 : index
    %1 = vector.load %arg2[%c0_1, %c0_2] : memref<32x20xbf16, #tpu.memory_space<vmem>>, vector<32x20xbf16>
    %cst = arith.constant dense<0.000000e+00> : vector<32x16xf32>
    %2 = tpu.matmul %1, %0, %cst {dimension_numbers = #tpu.dot_dimension_numbers<[1], [0], [0], [1], [0, 0, 1, 1], [], []>} : vector<32x20xbf16>, vector<20x16xbf16>, vector<32x16xf32> -> vector<32x16xf32>
    %c0_3 = arith.constant 0 : index
    %c0_4 = arith.constant 0 : index
    %3 = vector.load %arg3[%c0_3, %c0_4] : memref<32x1xf32, #tpu.memory_space<vmem>>, vector<32x1xf32>
    %4 = vector.broadcast %3 : vector<32x1xf32> to vector<32x16xf32>
    %5 = arith.addf %2, %4 : vector<32x16xf32>
    %cst_5 = arith.constant 0.000000e+00 : f32
    %6 = vector.broadcast %cst_5 : f32 to vector<32x16xf32>
    %7 = arith.maximumf %5, %6 : vector<32x16xf32>
    %c0_6 = arith.constant 0 : index
    %c0_7 = arith.constant 0 : index
    %8 = vector.load %arg4[%c0_6, %c0_7] : memref<16x32xbf16, #tpu.memory_space<vmem>>, vector<16x32xbf16>
    %9 = arith.truncf %7 : vector<32x16xf32> to vector<32x16xbf16>
    %cst_8 = arith.constant dense<0.000000e+00> : vector<16x16xf32>
    %10 = tpu.matmul %8, %9, %cst_8 {dimension_numbers = #tpu.dot_dimension_numbers<[1], [0], [0], [1], [0, 0, 1, 1], [], []>} : vector<16x32xbf16>, vector<32x16xbf16>, vector<16x16xf32> -> vector<16x16xf32>
    %c0_9 = arith.constant 0 : index
    %c0_10 = arith.constant 0 : index
    %11 = vector.load %arg5[%c0_9, %c0_10] : memref<16x1xf32, #tpu.memory_space<vmem>>, vector<16x1xf32>
    %12 = vector.broadcast %11 : vector<16x1xf32> to vector<16x16xf32>
    %13 = arith.addf %10, %12 : vector<16x16xf32>
    %cst_11 = arith.constant 0.000000e+00 : f32
    %14 = vector.broadcast %cst_11 : f32 to vector<16x16xf32>
    %15 = arith.maximumf %13, %14 : vector<16x16xf32>
    %c0_12 = arith.constant 0 : index
    %c0_13 = arith.constant 0 : index
    %16 = vector.load %arg6[%c0_12, %c0_13] : memref<8x16xbf16, #tpu.memory_space<vmem>>, vector<8x16xbf16>
    %17 = arith.truncf %15 : vector<16x16xf32> to vector<16x16xbf16>
    %cst_14 = arith.constant dense<0.000000e+00> : vector<8x16xf32>
    %18 = tpu.matmul %16, %17, %cst_14 {dimension_numbers = #tpu.dot_dimension_numbers<[1], [0], [0], [1], [0, 0, 1, 1], [], []>} : vector<8x16xbf16>, vector<16x16xbf16>, vector<8x16xf32> -> vector<8x16xf32>
    %c0_15 = arith.constant 0 : index
    %c0_16 = arith.constant 0 : index
    %19 = vector.load %arg7[%c0_15, %c0_16] : memref<8x1xf32, #tpu.memory_space<vmem>>, vector<8x1xf32>
    %20 = vector.broadcast %19 : vector<8x1xf32> to vector<8x16xf32>
    %21 = arith.addf %18, %20 : vector<8x16xf32>
    %c0_17 = arith.constant 0 : index
    %c0_18 = arith.constant 0 : index
    %22 = vector.load %arg8[%c0_17, %c0_18] : memref<8x16xf32, #tpu.memory_space<vmem>>, vector<8x16xf32>
    tpu.vector_store %arg8[%c0_17, %c0_18], %21 {strides = array<i32>} : memref<8x16xf32, #tpu.memory_space<vmem>>, vector<8x16xf32>,
    return
  }
  func.func @transform_0(%arg0: i32) -> (i32, i32) {
    %c0_i32 = arith.constant 0 : i32
    %c0_i32_0 = arith.constant 0 : i32
    return %c0_i32, %arg0 : i32, i32
  }
  func.func @transform_1(%arg0: i32) -> (i32, i32) {
    %c0_i32 = arith.constant 0 : i32
    %c0_i32_0 = arith.constant 0 : i32
    %c0_i32_1 = arith.constant 0 : i32
    return %c0_i32, %c0_i32_0 : i32, i32
  }
  func.func @transform_2(%arg0: i32) -> (i32, i32) {
    %c0_i32 = arith.constant 0 : i32
    %c0_i32_0 = arith.constant 0 : i32
    %c0_i32_1 = arith.constant 0 : i32
    return %c0_i32, %c0_i32_0 : i32, i32
  }
  func.func @transform_3(%arg0: i32) -> (i32, i32) {
    %c0_i32 = arith.constant 0 : i32
    %c0_i32_0 = arith.constant 0 : i32
    %c0_i32_1 = arith.constant 0 : i32
    return %c0_i32, %c0_i32_0 : i32, i32
  }
  func.func @transform_4(%arg0: i32) -> (i32, i32) {
    %c0_i32 = arith.constant 0 : i32
    %c0_i32_0 = arith.constant 0 : i32
    %c0_i32_1 = arith.constant 0 : i32
    return %c0_i32, %c0_i32_0 : i32, i32
  }
  func.func @transform_5(%arg0: i32) -> (i32, i32) {
    %c0_i32 = arith.constant 0 : i32
    %c0_i32_0 = arith.constant 0 : i32
    %c0_i32_1 = arith.constant 0 : i32
    return %c0_i32, %c0_i32_0 : i32, i32
  }
  func.func @transform_6(%arg0: i32) -> (i32, i32) {
    %c0_i32 = arith.constant 0 : i32
    %c0_i32_0 = arith.constant 0 : i32
    %c0_i32_1 = arith.constant 0 : i32
    return %c0_i32, %c0_i32_0 : i32, i32
  }
  func.func @transform_7(%arg0: i32) -> (i32, i32) {
    %c0_i32 = arith.constant 0 : i32
    %c0_i32_0 = arith.constant 0 : i32
    return %c0_i32, %arg0 : i32, i32
  }
}

</mosaic_0001>

<llo_original>
// kernel: tpu_custom_call.1
$region0: #{tpu_custom_call.1}
  #allocation0 [shape = 'u32[]', space=smem, size = 0x4, offset = 0x4, fixed_abs, tag = 'smem constant byte address 0x4 - core index']
  #allocation1 [shape = 'u32[144,128]{1,0:T(1,128)}', space=vmem, size = 0x12000, scoped, tag = 'internal scratch']
  %s0 = inlined_call_operand.vmem [shape: bf16[20,16], index: 0, kind: input, shape index: {}]
  %s1 = inlined_call_operand.vmem [shape: bf16[32,20], index: 1, kind: input, shape index: {}]
  %s2 = inlined_call_operand.vmem [shape: f32[32,1], index: 2, kind: input, shape index: {}]
  %s3 = inlined_call_operand.vmem [shape: bf16[16,32], index: 3, kind: input, shape index: {}]
  %s4 = inlined_call_operand.vmem [shape: f32[16,1], index: 4, kind: input, shape index: {}]
  %s5 = inlined_call_operand.vmem [shape: bf16[8,16], index: 5, kind: input, shape index: {}]
  %s6 = inlined_call_operand.vmem [shape: f32[8,1], index: 6, kind: input, shape index: {}]
  %s7 = inlined_call_operand.hbm [shape: f32[8,16], index: 7, kind: output, shape index: {}]
  %s8 = sld [smem:[#allocation0]]
  $region38: #{tpu_custom_call.1} parent=0
    _
  %s10 = ssub.s32 1, %s8
  %s11 = scalar_select 0, %s10, %s8
  $region1: #{tpu_custom_call.1} parent=0
    #allocation2 [shape = 'u8[4096]{0}', space=vmem, size = 0x1000, scoped, tag = 'output window, operand 0, single buffered']
    #allocation3 [shape = 's32[1]{0}', space=sflag, size = 0x4, scoped, tag = 'scoped memory for tpu_custom_call.1']
    %12 = vsyncpa [#allocation3], 0
    // Predicated region
    $region2: #{tpu_custom_call.1} parent=1 // pred_check
      _
    $region3: #{tpu_custom_call.1} parent=1 // pred_check_branch
      %14 = sbr.rel (0) target = $region5
    $region4: #{tpu_custom_call.1} parent=1 // pred_region
      _
    $region5: #{tpu_custom_call.1} parent=1 // pred_fallthru
      _
    // Predicated region
    $region6: #{tpu_custom_call.1} parent=1 // pred_check
      _
    $region7: #{tpu_custom_call.1} parent=1 // pred_check_branch
      %16 = sbr.rel (0) target = $region9
    $region8: #{tpu_custom_call.1} parent=1 // pred_region
      _
    $region9: #{tpu_custom_call.1} parent=1 // pred_fallthru
      _
    // Predicated region
    $region10: #{tpu_custom_call.1} parent=1 // pred_check
      _
    $region11: #{tpu_custom_call.1} parent=1 // pred_check_branch
      %18 = sbr.rel (0) target = $region13
    $region12: #{tpu_custom_call.1} parent=1 // pred_region
      _
    $region13: #{tpu_custom_call.1} parent=1 // pred_fallthru
      _
    // Predicated region
    $region14: #{tpu_custom_call.1} parent=1 // pred_check
      _
    $region15: #{tpu_custom_call.1} parent=1 // pred_check_branch
      %20 = sbr.rel (0) target = $region17
    $region16: #{tpu_custom_call.1} parent=1 // pred_region
      _
    $region17: #{tpu_custom_call.1} parent=1 // pred_fallthru
      _
    // Predicated region
    $region18: #{tpu_custom_call.1} parent=1 // pred_check
      _
    $region19: #{tpu_custom_call.1} parent=1 // pred_check_branch
      %22 = sbr.rel (0) target = $region21
    $region20: #{tpu_custom_call.1} parent=1 // pred_region
      _
    $region21: #{tpu_custom_call.1} parent=1 // pred_fallthru
      _
    // Predicated region
    $region22: #{tpu_custom_call.1} parent=1 // pred_check
      _
    $region23: #{tpu_custom_call.1} parent=1 // pred_check_branch
      %24 = sbr.rel (0) target = $region25
    $region24: #{tpu_custom_call.1} parent=1 // pred_region
      _
    $region25: #{tpu_custom_call.1} parent=1 // pred_fallthru
      _
    // Predicated region
    $region26: #{tpu_custom_call.1} parent=1 // pred_check
      _
    $region27: #{tpu_custom_call.1} parent=1 // pred_check_branch
      %26 = sbr.rel (0) target = $region29
    $region28: #{tpu_custom_call.1} parent=1 // pred_region
      _
    $region29: #{tpu_custom_call.1} parent=1 // pred_fallthru
      _
    %v28 = vld [vmem:[%s0] sm:$0xf]
    %v29 = vld [vmem:[%s0 + $0x4] sm:$0xf]
    %v30 = vld [vmem:[%s0 + $0x8] sm:$0x3]
    %v31 = vld [vmem:[%s1] sm:$0xf]
    %v32 = vld [vmem:[%s1 + $0x4] sm:$0xf]
    %v33 = vld [vmem:[%s1 + $0x8] sm:$0xf]
    %v34 = vld [vmem:[%s1 + $0xc] sm:$0xf]
    %v35 = vld [vmem:[%s2] sm:$0xff]
    %v36 = vld [vmem:[%s2 + $0x8] sm:$0xff]
    %v37 = vld [vmem:[%s2 + $0x10] sm:$0xff]
    %v38 = vld [vmem:[%s2 + $0x18] sm:$0xff]
    %40 = vset.pattern.permute.xlu0 0
    %41 = vperm.xlu0 %40, %v35
    %v42 = vpop.permute.xlu0 %41
    %45 = vset.pattern.permute.xlu0 0
    %46 = vperm.xlu0 %45, %v36
    %v47 = vpop.permute.xlu0 %46
    %50 = vset.pattern.permute.xlu0 0
    %51 = vperm.xlu0 %50, %v37
    %v52 = vpop.permute.xlu0 %51
    %55 = vset.pattern.permute.xlu0 0
    %56 = vperm.xlu0 %55, %v38
    %v57 = vpop.permute.xlu0 %56
    %v63 = vunpack.c.l.b16 %v31
    %v64 = vunpack.c.l.b16 %v32
    %v65 = vunpack.c.l.b16 %v33
    %v66 = vunpack.c.l.b16 %v34
    %v67 = vpack.c.b16 %v64, %v63
    %v68 = vpack.c.b16 %v66, %v65
    %v72 = vunpack.c.l.b16 %v28
    %v73 = vunpack.c.l.b16 %v29
    %v74 = vunpack.c.l.b16 %v30
    %v75 = vpack.c.b16 %v73, %v72
    %v76 = vpack.c.b16 %v74, %v74
    %vm78 = vcmask 162816
    %v80 = vsel %vm78, %v67, 0
    %v83 = vsel %vm78, %v68, 0
    %vm85 = vcmask 1041408
    %v87 = vsel %vm85, %v76, 0
    %89 = vmatprep.subr.bf16.mxu0 0
    %90 = vmatpush1.bf16.msra.mxu0 %v75
    %91 = vmatprep.subr.bf16.mxu0 0
    %92 = vmatpush1.bf16.msra.mxu0 %v87
    %93 = vmatprep.subr.bf16.mxu0 0
    %94 = vmatpush1.bf16.msra.mxu0 0
    %95 = vmatprep.subr.bf16.mxu0 0
    %96 = vmatpush1.bf16.msra.mxu0 0
    %97 = vmatprep.subr.bf16.mxu0 0
    %98 = vmatpush1.bf16.msra.mxu0 0
    %99 = vmatprep.subr.bf16.mxu0 0
    %100 = vmatpush1.bf16.msra.mxu0 0
    %101 = vmatprep.subr.bf16.mxu0 0
    %102 = vmatpush1.bf16.msra.mxu0 0
    %103 = vmatprep.subr.bf16.mxu0 0
    %104 = vmatpush1.bf16.msra.mxu0 0
    %105 = vmatprep.subr.bf16.mxu0 0
    %106 = vmatpush1.bf16.msra.mxu0 0
    %107 = vmatprep.subr.bf16.mxu0 0
    %108 = vmatpush1.bf16.msra.mxu0 0
    %109 = vmatprep.subr.bf16.mxu0 0
    %110 = vmatpush1.bf16.msra.mxu0 0
    %111 = vmatprep.subr.bf16.mxu0 0
    %112 = vmatpush1.bf16.msra.mxu0 0
    %113 = vmatprep.subr.bf16.mxu0 0
    %114 = vmatpush1.bf16.msra.mxu0 0
    %115 = vmatprep.subr.bf16.mxu0 0
    %116 = vmatpush1.bf16.msra.mxu0 0
    %117 = vmatprep.subr.bf16.mxu0 0
    %118 = vmatpush1.bf16.msra.mxu0 0
    %119 = vmatprep.subr.bf16.mxu0 0
    %120 = vmatpush1.bf16.msra.mxu0 0
    %121 = vmatprep.mubr.bf16.mxu0 0
    %122 = vmatmul.mubr.bf16.gmra.mrb[0].mxu0 %v80
    %v123 = vpop.f32.mrb[0].mxu0
    %v124 = vadd.f32 %v42, %v123
    %v125 = vpop.f32.mrb[0].mxu0
    %v126 = vpop.f32.mrb[0].mxu0
    %v127 = vadd.f32 %v47, %v126
    %v128 = vpop.f32.mrb[0].mxu0
    %129 = vmatprep.mubr.bf16.mxu0 0
    %130 = vmatmul.mubr.bf16.gmra.mrb[0].mxu0 %v83
    %v131 = vpop.f32.mrb[0].mxu0
    %v132 = vadd.f32 %v52, %v131
    %v133 = vpop.f32.mrb[0].mxu0
    %v134 = vpop.f32.mrb[0].mxu0
    %v135 = vadd.f32 %v57, %v134
    %v136 = vpop.f32.mrb[0].mxu0
    %137 = vdwg.mxu0
    %v138 = vmax.f32 %v124, 0.0
    %v139 = vmax.f32 %v127, 0.0
    %v140 = vmax.f32 %v132, 0.0
    %v141 = vmax.f32 %v135, 0.0
    %v142 = vld [vmem:[%s3] sm:$0xf]
    %v143 = vld [vmem:[%s3 + $0x4] sm:$0xf]
    %v144 = vpack.c.bf16 %v139, %v138
    %v145 = vpack.c.bf16 %v141, %v140
    %v146 = vld [vmem:[%s4] sm:$0xff]
    %v147 = vld [vmem:[%s4 + $0x8] sm:$0xff]
    %149 = vset.pattern.permute.xlu0 0
    %150 = vperm.xlu0 %149, %v146
    %v151 = vpop.permute.xlu0 %150
    %154 = vset.pattern.permute.xlu0 0
    %155 = vperm.xlu0 %154, %v147
    %v156 = vpop.permute.xlu0 %155
    %v160 = vunpack.c.l.b16 %v142
    %v161 = vunpack.c.l.b16 %v143
    %v162 = vpack.c.b16 %v161, %v160
    %vm163 = vcmask 261120
    %v165 = vsel %vm163, %v162, 0
    %167 = vmatprep.subr.bf16.mxu0 0
    %168 = vmatpush1.bf16.msra.mxu0 %v144
    %169 = vmatprep.subr.bf16.mxu0 0
    %170 = vmatpush1.bf16.msra.mxu0 %v145
    %171 = vmatprep.subr.bf16.mxu0 0
    %172 = vmatpush1.bf16.msra.mxu0 0
    %173 = vmatprep.subr.bf16.mxu0 0
    %174 = vmatpush1.bf16.msra.mxu0 0
    %175 = vmatprep.subr.bf16.mxu0 0
    %176 = vmatpush1.bf16.msra.mxu0 0
    %177 = vmatprep.subr.bf16.mxu0 0
    %178 = vmatpush1.bf16.msra.mxu0 0
    %179 = vmatprep.subr.bf16.mxu0 0
    %180 = vmatpush1.bf16.msra.mxu0 0
    %181 = vmatprep.subr.bf16.mxu0 0
    %182 = vmatpush1.bf16.msra.mxu0 0
    %183 = vmatprep.subr.bf16.mxu0 0
    %184 = vmatpush1.bf16.msra.mxu0 0
    %185 = vmatprep.subr.bf16.mxu0 0
    %186 = vmatpush1.bf16.msra.mxu0 0
    %187 = vmatprep.subr.bf16.mxu0 0
    %188 = vmatpush1.bf16.msra.mxu0 0
    %189 = vmatprep.subr.bf16.mxu0 0
    %190 = vmatpush1.bf16.msra.mxu0 0
    %191 = vmatprep.subr.bf16.mxu0 0
    %192 = vmatpush1.bf16.msra.mxu0 0
    %193 = vmatprep.subr.bf16.mxu0 0
    %194 = vmatpush1.bf16.msra.mxu0 0
    %195 = vmatprep.subr.bf16.mxu0 0
    %196 = vmatpush1.bf16.msra.mxu0 0
    %197 = vmatprep.subr.bf16.mxu0 0
    %198 = vmatpush1.bf16.msra.mxu0 0
    %199 = vmatprep.mubr.bf16.mxu0 0
    %200 = vmatmul.mubr.bf16.gmra.mrb[0].mxu0 %v165
    %v201 = vpop.f32.mrb[0].mxu0
    %v202 = vadd.f32 %v151, %v201
    %v203 = vpop.f32.mrb[0].mxu0
    %v204 = vpop.f32.mrb[0].mxu0
    %v205 = vadd.f32 %v156, %v204
    %v206 = vpop.f32.mrb[0].mxu0
    %207 = vdwg.mxu0
    %v208 = vmax.f32 %v202, 0.0
    %v209 = vmax.f32 %v205, 0.0
    %v210 = vld [vmem:[%s5] sm:$0xf]
    %v211 = vpack.c.bf16 %v209, %v208
    %v212 = vld [vmem:[%s6] sm:$0xff]
    %214 = vset.pattern.permute.xlu0 0
    %215 = vperm.xlu0 %214, %v212
    %v216 = vpop.permute.xlu0 %215
    %vm218 = vcmask 130048
    %v220 = vsel %vm218, %v210, 0
    %222 = vmatprep.subr.bf16.mxu0 0
    %223 = vmatpush1.bf16.msra.mxu0 %v211
    %224 = vmatprep.subr.bf16.mxu0 0
    %225 = vmatpush1.bf16.msra.mxu0 0
    %226 = vmatprep.subr.bf16.mxu0 0
    %227 = vmatpush1.bf16.msra.mxu0 0
    %228 = vmatprep.subr.bf16.mxu0 0
    %229 = vmatpush1.bf16.msra.mxu0 0
    %230 = vmatprep.subr.bf16.mxu0 0
    %231 = vmatpush1.bf16.msra.mxu0 0
    %232 = vmatprep.subr.bf16.mxu0 0
    %233 = vmatpush1.bf16.msra.mxu0 0
    %234 = vmatprep.subr.bf16.mxu0 0
    %235 = vmatpush1.bf16.msra.mxu0 0
    %236 = vmatprep.subr.bf16.mxu0 0
    %237 = vmatpush1.bf16.msra.mxu0 0
    %238 = vmatprep.subr.bf16.mxu0 0
    %239 = vmatpush1.bf16.msra.mxu0 0
    %240 = vmatprep.subr.bf16.mxu0 0
    %241 = vmatpush1.bf16.msra.mxu0 0
    %242 = vmatprep.subr.bf16.mxu0 0
    %243 = vmatpush1.bf16.msra.mxu0 0
    %244 = vmatprep.subr.bf16.mxu0 0
    %245 = vmatpush1.bf16.msra.mxu0 0
    %246 = vmatprep.subr.bf16.mxu0 0
    %247 = vmatpush1.bf16.msra.mxu0 0
    %248 = vmatprep.subr.bf16.mxu0 0
    %249 = vmatpush1.bf16.msra.mxu0 0
    %250 = vmatprep.subr.bf16.mxu0 0
    %251 = vmatpush1.bf16.msra.mxu0 0
    %252 = vmatprep.subr.bf16.mxu0 0
    %253 = vmatpush1.bf16.msra.mxu0 0
    %254 = vmatprep.mubr.bf16.mxu0 0
    %255 = vmatmul.mubr.bf16.gmra.mrb[0].mxu0 %v220
    %v256 = vpop.f32.mrb[0].mxu0
    %v257 = vadd.f32 %v216, %v256
    %v258 = vpop.f32.mrb[0].mxu0
    %v259 = vpop.f32.mrb[0].mxu0
    %v260 = vpop.f32.mrb[0].mxu0
    %261 = vdwg.mxu0
    %262 = vst.msk [vmem:[#allocation2] sm:$0xff] %vm218, %v257
    // Predicated region
    $region30: #{tpu_custom_call.1} parent=1 // pred_check
      _
    $region31: #{tpu_custom_call.1} parent=1 // pred_check_branch
      %264 = sbr.rel (0) target = $region33
    $region32: #{tpu_custom_call.1} parent=1 // pred_region
      %s266 = ssub.s32 128, 128
      %267 = vsyncadd [#allocation3], %s266
      %s269 = sshll.u32 [#allocation2], 4
      %s270 = int_to_ptr.vmem [resolvable:$true] %s269
      %272 = dma.vmem_to_hbm [thread:$0]  %s270, 128, %s7, [#allocation3]
    $region33: #{tpu_custom_call.1} parent=1 // pred_fallthru
      _
    // Predicated region
    $region34: #{tpu_custom_call.1} parent=1 // pred_check
      _
    $region35: #{tpu_custom_call.1} parent=1 // pred_check_branch
      %274 = sbr.rel (0) target = $region37
    $region36: #{tpu_custom_call.1} parent=1 // pred_region
      %275 = dma.done [#allocation3], 128
    $region37: #{tpu_custom_call.1} parent=1 // pred_fallthru
      _
    %276 = vsyncpa [#allocation3], 1

</llo_original>
